<compile_context>
chip_gen: v7x
topology: tpu7x:2x2x1
jax: 0.10.0
libtpu: 0.0.40
codegen_flags: <defaults>
</compile_context>

<pallas_src>
import math

import jax
import jax.numpy as jnp
from jax.experimental import pallas as pl
from jax.experimental.pallas import tpu as pltpu


# ----------------------------------------------------------------------------
# Kernel: fused 3-layer MLP, ReLU after every layer.
#   matmuls: bf16 operands on the MXU, f32 accumulation; bias-add / ReLU in f32
#   on the VPU (safe on v5e: no bf16 VPU there).
# ----------------------------------------------------------------------------
def _mlp_kernel(x_ref, w1_ref, b1_ref, w2_ref, b2_ref, w3_ref, b3_ref, o_ref):
    x = x_ref[...].astype(w1_ref.dtype)          # f32 HBM tile -> bf16 in-reg
    h1 = jnp.dot(x, w1_ref[...], preferred_element_type=jnp.float32) + b1_ref[...]
    h1 = jnp.maximum(h1, 0.0)
    h2 = jnp.dot(h1.astype(w2_ref.dtype), w2_ref[...],
                 preferred_element_type=jnp.float32) + b2_ref[...]
    h2 = jnp.maximum(h2, 0.0)
    h3 = jnp.dot(h2.astype(w3_ref.dtype), w3_ref[...],
                 preferred_element_type=jnp.float32) + b3_ref[...]
    o_ref[...] = jnp.maximum(h3, 0.0).astype(o_ref.dtype)


def _round_up(a, b):
    return ((a + b - 1) // b) * b


def _is_multi_tc_chip():
    # Only v7x has 2 TensorCores per chip; v5e/v6e gain nothing from splitting
    # a small M into extra grid steps.
    try:
        kind = jax.devices()[0].device_kind.lower()
        return ("v7" in kind) or ("7x" in kind)
    except Exception:
        return False


def _vmem_capacity_bytes():
    try:
        return int(pltpu.get_tpu_info().vmem_capacity_bytes)
    except Exception:
        return 64 * 1024 * 1024          # v7x floor -> conservative everywhere


def _choose_tile(M_rows, K_eff, H1, H2, N_eff, out_itemsize):
    """K/N-aware row-tile + VMEM-limit selection."""
    vmem_cap = _vmem_capacity_bytes()

    # Resident weights (bf16) + biases (f32); charge 2x for the pipeline's
    # default double-buffering of constant-index blocks.
    w_bytes = 2 * (2 * (K_eff * H1 + H1 * H2 + H2 * N_eff)
                   + 4 * (H1 + H2 + N_eff))
    # Per-row VMEM: double-buffered f32 x tile + double-buffered output tile
    # + f32/bf16 intermediates.
    per_row = (2 * 4 * K_eff + 2 * out_itemsize * N_eff
               + 6 * (H1 + H2) + 2 * K_eff)

    budget = vmem_cap // 2                              # generous headroom
    tile_cap = (budget - w_bytes) // per_row
    tile_cap = max(16, min(2048, (tile_cap // 16) * 16))
    # TODO(synk): for very large K (e.g. H*W >= 32k) add an "arbitrary" K grid
    # axis with an f32 accumulator for layer 1; here we only shrink the row
    # tile via the VMEM budget.

    if M_rows <= tile_cap:
        tile = M_rows                                   # one block == full rows
    else:
        tile = tile_cap                                 # ragged tail OOB-masked

    # v7x only: keep >= 2 grid steps so both TensorCores get work.
    if _is_multi_tc_chip() and pl.cdiv(M_rows, tile) < 2 and M_rows > 16:
        tile = max(16, _round_up(pl.cdiv(M_rows, 2), 16))

    grid_m = pl.cdiv(M_rows, tile)
    working = w_bytes + tile * per_row
    vmem_limit = int(min(int(0.85 * vmem_cap),
                         max(32 * 1024 * 1024, int(1.5 * working) + (8 << 20))))
    return tile, grid_m, vmem_limit


def encode_structure_forward(x, params, *, out_dtype=jnp.float32,
                             compute_dtype=jnp.bfloat16, row_pack=8):
    """x: (B, C, *spatial) float32.  Returns (B, C, output_dim) in out_dtype."""
    w1, b1, w2, b2, w3, b3 = params
    B, C = x.shape[0], x.shape[1]
    K = math.prod(x.shape[2:])       # input_dim (plain python int)
    N = w3.shape[1]                  # output_dim
    M = B * C

    # ---- lane-dense block-diagonal row packing ------------------------------
    pack = 1
    if (row_pack > 1 and M % row_pack == 0
            and K * row_pack <= 2048 and N * row_pack <= 4096):
        pack = row_pack

    x2d = x.reshape(M // pack, pack * K)   # free row-major view; stays f32
    if pack > 1:
        # In a real model these block-diagonal weights would be precomputed
        # once; they are tiny for the K/N range where packing is enabled.
        w1u = jnp.kron(jnp.eye(pack, dtype=w1.dtype), w1)
        w2u = jnp.kron(jnp.eye(pack, dtype=w2.dtype), w2)
        w3u = jnp.kron(jnp.eye(pack, dtype=w3.dtype), w3)
        b1u = jnp.tile(b1, (1, pack))
        b2u = jnp.tile(b2, (1, pack))
        b3u = jnp.tile(b3, (1, pack))
    else:
        w1u, w2u, w3u, b1u, b2u, b3u = w1, w2, w3, b1, b2, b3

    K_eff, H1, H2, N_eff = pack * K, pack * 24, pack * 48, pack * N
    M_rows = M // pack

    w1c, w2c, w3c = (w.astype(compute_dtype) for w in (w1u, w2u, w3u))
    b1c, b2c, b3c = (b.astype(jnp.float32) for b in (b1u, b2u, b3u))

    tile, grid_m, vmem_limit = _choose_tile(
        M_rows, K_eff, H1, H2, N_eff, jnp.dtype(out_dtype).itemsize)

    out = pl.pallas_call(
        _mlp_kernel,
        out_shape=jax.ShapeDtypeStruct((M_rows, N_eff), out_dtype),
        grid_spec=pltpu.PrefetchScalarGridSpec(
            num_scalar_prefetch=0,
            grid=(grid_m,),
            in_specs=[
                pl.BlockSpec((tile, K_eff), lambda i: (i, 0)),   # x rows tiled
                pl.BlockSpec(w1c.shape, lambda i: (0, 0)),       # weights resident
                pl.BlockSpec(b1c.shape, lambda i: (0, 0)),
                pl.BlockSpec(w2c.shape, lambda i: (0, 0)),
                pl.BlockSpec(b2c.shape, lambda i: (0, 0)),
                pl.BlockSpec(w3c.shape, lambda i: (0, 0)),
                pl.BlockSpec(b3c.shape, lambda i: (0, 0)),
            ],
            out_specs=pl.BlockSpec((tile, N_eff), lambda i: (i, 0)),
        ),
        compiler_params=pltpu.CompilerParams(
            dimension_semantics=("parallel",),       # megacore sharding on v7x
            vmem_limit_bytes=vmem_limit,             # budget-derived, not fixed
        ),
    )(x2d, w1c, b1c, w2c, b2c, w3c, b3c)

    # (M/pack, pack*N) -> (M, N) -> (B, C, N): free row-major reshapes.
    return out.reshape(B, C, N)


def init_params(key, input_dim, output_dim):
    """Deterministic synthetic init (shapes match the nn.Linear layers)."""
    ks = jax.random.split(key, 6)
    # weights stored (in, out) so the kernel computes x @ W (matches nn.Linear)
    w1 = jax.random.normal(ks[0], (input_dim, 24), jnp.float32) * 0.1
    b1 = jax.random.normal(ks[1], (1, 24), jnp.float32) * 0.1
    w2 = jax.random.normal(ks[2], (24, 48), jnp.float32) * 0.1
    b2 = jax.random.normal(ks[3], (1, 48), jnp.float32) * 0.1
    w3 = jax.random.normal(ks[4], (48, output_dim), jnp.float32) * 0.1
    b3 = jax.random.normal(ks[5], (1, output_dim), jnp.float32) * 0.1
    return (w1, b1, w2, b2, w3, b3)


def _reference(x, params, compute_dtype=jnp.bfloat16):
    """Plain-JAX reference with the same bf16-matmul / f32-accumulate recipe."""
    w1, b1, w2, b2, w3, b3 = params
    B, C = x.shape[0], x.shape[1]
    x2d = x.reshape(B, C, -1).astype(compute_dtype)
    h = jax.nn.relu(jnp.dot(x2d, w1.astype(compute_dtype),
                            preferred_element_type=jnp.float32) + b1)
    h = jax.nn.relu(jnp.dot(h.astype(compute_dtype), w2.astype(compute_dtype),
                            preferred_element_type=jnp.float32) + b2)
    return jax.nn.relu(jnp.dot(h.astype(compute_dtype), w3.astype(compute_dtype),
                               preferred_element_type=jnp.float32) + b3)


if __name__ == "__main__":
    key = jax.random.PRNGKey(0)
    k_x, k_p = jax.random.split(key)

    B, C, H, W = 2, 4, 4, 4           # input_dim = H*W = 16, M = B*C = 8
    input_dim, output_dim = H * W, 32

    x = jax.random.normal(k_x, (B, C, H, W), jnp.float32)
    params = init_params(k_p, input_dim, output_dim)

    out = jax.block_until_ready(encode_structure_forward(x, params))   # packed path
    ref = jax.block_until_ready(_reference(x, params))
    assert out.shape == (B, C, output_dim)
    assert jnp.allclose(out, ref, atol=2e-2, rtol=2e-2), (
        float(jnp.max(jnp.abs(out - ref))))

    # Also exercise the non-packed fallback path once (same kernel, pack=1).
    out_np = jax.block_until_ready(
        encode_structure_forward(x, params, row_pack=1))
    assert jnp.allclose(out_np, ref, atol=2e-2, rtol=2e-2), (
        float(jnp.max(jnp.abs(out_np - ref))))

    print("KERNEL_OK")
</pallas_src>

<mosaic_0001>
module attributes {stable_mosaic.version = 11 : i64} {
  func.func @_mlp_kernel(%arg0: i32, %arg1: memref<1x128xf32, #tpu.memory_space<vmem>>, %arg2: memref<128x192xbf16, #tpu.memory_space<vmem>>, %arg3: memref<1x192xf32, #tpu.memory_space<vmem>>, %arg4: memref<192x384xbf16, #tpu.memory_space<vmem>>, %arg5: memref<1x384xf32, #tpu.memory_space<vmem>>, %arg6: memref<384x256xbf16, #tpu.memory_space<vmem>>, %arg7: memref<1x256xf32, #tpu.memory_space<vmem>>, %arg8: memref<1x256xf32, #tpu.memory_space<vmem>>) attributes {dimension_semantics = [#tpu.dimension_semantics<parallel>], iteration_bounds = array<i64: 1>, scalar_prefetch = 0 : i64, scratch_operands = 0 : i64, tpu.core_type = #tpu.core_type<tc>, window_params = [{transform_indices = @transform_0, window_bounds = array<i64: 1, 128>}, {pipeline_mode = #tpu.pipeline_mode<synchronous>, transform_indices = @transform_1, window_bounds = array<i64: 128, 192>}, {pipeline_mode = #tpu.pipeline_mode<synchronous>, transform_indices = @transform_2, window_bounds = array<i64: 1, 192>}, {pipeline_mode = #tpu.pipeline_mode<synchronous>, transform_indices = @transform_3, window_bounds = array<i64: 192, 384>}, {pipeline_mode = #tpu.pipeline_mode<synchronous>, transform_indices = @transform_4, window_bounds = array<i64: 1, 384>}, {pipeline_mode = #tpu.pipeline_mode<synchronous>, transform_indices = @transform_5, window_bounds = array<i64: 384, 256>}, {pipeline_mode = #tpu.pipeline_mode<synchronous>, transform_indices = @transform_6, window_bounds = array<i64: 1, 256>}, {transform_indices = @transform_7, window_bounds = array<i64: 1, 256>}]} {
    %c0 = arith.constant 0 : index
    %c0_0 = arith.constant 0 : index
    %0 = vector.load %arg1[%c0, %c0_0] : memref<1x128xf32, #tpu.memory_space<vmem>>, vector<1x128xf32>
    %1 = arith.truncf %0 : vector<1x128xf32> to vector<1x128xbf16>
    %c0_1 = arith.constant 0 : index
    %c0_2 = arith.constant 0 : index
    %2 = vector.load %arg2[%c0_1, %c0_2] : memref<128x192xbf16, #tpu.memory_space<vmem>>, vector<128x192xbf16>
    %cst = arith.constant dense<0.000000e+00> : vector<1x192xf32>
    %3 = tpu.matmul %1, %2, %cst {dimension_numbers = #tpu.dot_dimension_numbers<[1], [0], [0], [1], [0, 0, 1, 1], [], []>} : vector<1x128xbf16>, vector<128x192xbf16>, vector<1x192xf32> -> vector<1x192xf32>
    %c0_3 = arith.constant 0 : index
    %c0_4 = arith.constant 0 : index
    %4 = vector.load %arg3[%c0_3, %c0_4] : memref<1x192xf32, #tpu.memory_space<vmem>>, vector<1x192xf32>
    %5 = arith.addf %3, %4 : vector<1x192xf32>
    %cst_5 = arith.constant 0.000000e+00 : f32
    %6 = vector.broadcast %cst_5 : f32 to vector<1x192xf32>
    %7 = arith.maximumf %5, %6 : vector<1x192xf32>
    %8 = arith.truncf %7 : vector<1x192xf32> to vector<1x192xbf16>
    %c0_6 = arith.constant 0 : index
    %c0_7 = arith.constant 0 : index
    %9 = vector.load %arg4[%c0_6, %c0_7] : memref<192x384xbf16, #tpu.memory_space<vmem>>, vector<192x384xbf16>
    %cst_8 = arith.constant dense<0.000000e+00> : vector<1x384xf32>
    %10 = tpu.matmul %8, %9, %cst_8 {dimension_numbers = #tpu.dot_dimension_numbers<[1], [0], [0], [1], [0, 0, 1, 1], [], []>} : vector<1x192xbf16>, vector<192x384xbf16>, vector<1x384xf32> -> vector<1x384xf32>
    %c0_9 = arith.constant 0 : index
    %c0_10 = arith.constant 0 : index
    %11 = vector.load %arg5[%c0_9, %c0_10] : memref<1x384xf32, #tpu.memory_space<vmem>>, vector<1x384xf32>
    %12 = arith.addf %10, %11 : vector<1x384xf32>
    %cst_11 = arith.constant 0.000000e+00 : f32
    %13 = vector.broadcast %cst_11 : f32 to vector<1x384xf32>
    %14 = arith.maximumf %12, %13 : vector<1x384xf32>
    %15 = arith.truncf %14 : vector<1x384xf32> to vector<1x384xbf16>
    %c0_12 = arith.constant 0 : index
    %c0_13 = arith.constant 0 : index
    %16 = vector.load %arg6[%c0_12, %c0_13] : memref<384x256xbf16, #tpu.memory_space<vmem>>, vector<384x256xbf16>
    %cst_14 = arith.constant dense<0.000000e+00> : vector<1x256xf32>
    %17 = tpu.matmul %15, %16, %cst_14 {dimension_numbers = #tpu.dot_dimension_numbers<[1], [0], [0], [1], [0, 0, 1, 1], [], []>} : vector<1x384xbf16>, vector<384x256xbf16>, vector<1x256xf32> -> vector<1x256xf32>
    %c0_15 = arith.constant 0 : index
    %c0_16 = arith.constant 0 : index
    %18 = vector.load %arg7[%c0_15, %c0_16] : memref<1x256xf32, #tpu.memory_space<vmem>>, vector<1x256xf32>
    %19 = arith.addf %17, %18 : vector<1x256xf32>
    %cst_17 = arith.constant 0.000000e+00 : f32
    %20 = vector.broadcast %cst_17 : f32 to vector<1x256xf32>
    %21 = arith.maximumf %19, %20 : vector<1x256xf32>
    %c0_18 = arith.constant 0 : index
    %c0_19 = arith.constant 0 : index
    %22 = vector.load %arg8[%c0_18, %c0_19] : memref<1x256xf32, #tpu.memory_space<vmem>>, vector<1x256xf32>
    tpu.vector_store %arg8[%c0_18, %c0_19], %21 {strides = array<i32>} : memref<1x256xf32, #tpu.memory_space<vmem>>, vector<1x256xf32>,
    return
  }
  func.func @transform_0(%arg0: i32) -> (i32, i32) {
    %c0_i32 = arith.constant 0 : i32
    %c0_i32_0 = arith.constant 0 : i32
    return %arg0, %c0_i32 : i32, i32
  }
  func.func @transform_1(%arg0: i32) -> (i32, i32) {
    %c0_i32 = arith.constant 0 : i32
    %c0_i32_0 = arith.constant 0 : i32
    %c0_i32_1 = arith.constant 0 : i32
    return %c0_i32, %c0_i32_0 : i32, i32
  }
  func.func @transform_2(%arg0: i32) -> (i32, i32) {
    %c0_i32 = arith.constant 0 : i32
    %c0_i32_0 = arith.constant 0 : i32
    %c0_i32_1 = arith.constant 0 : i32
    return %c0_i32, %c0_i32_0 : i32, i32
  }
  func.func @transform_3(%arg0: i32) -> (i32, i32) {
    %c0_i32 = arith.constant 0 : i32
    %c0_i32_0 = arith.constant 0 : i32
    %c0_i32_1 = arith.constant 0 : i32
    return %c0_i32, %c0_i32_0 : i32, i32
  }
  func.func @transform_4(%arg0: i32) -> (i32, i32) {
    %c0_i32 = arith.constant 0 : i32
    %c0_i32_0 = arith.constant 0 : i32
    %c0_i32_1 = arith.constant 0 : i32
    return %c0_i32, %c0_i32_0 : i32, i32
  }
  func.func @transform_5(%arg0: i32) -> (i32, i32) {
    %c0_i32 = arith.constant 0 : i32
    %c0_i32_0 = arith.constant 0 : i32
    %c0_i32_1 = arith.constant 0 : i32
    return %c0_i32, %c0_i32_0 : i32, i32
  }
  func.func @transform_6(%arg0: i32) -> (i32, i32) {
    %c0_i32 = arith.constant 0 : i32
    %c0_i32_0 = arith.constant 0 : i32
    %c0_i32_1 = arith.constant 0 : i32
    return %c0_i32, %c0_i32_0 : i32, i32
  }
  func.func @transform_7(%arg0: i32) -> (i32, i32) {
    %c0_i32 = arith.constant 0 : i32
    %c0_i32_0 = arith.constant 0 : i32
    return %arg0, %c0_i32 : i32, i32
  }
}

</mosaic_0001>

<llo_original>
// kernel: tpu_custom_call.1
$region0: #{tpu_custom_call.1}
  #allocation0 [shape = 'u32[]', space=smem, size = 0x4, offset = 0x4, fixed_abs, tag = 'smem constant byte address 0x4 - core index']
  #allocation1 [shape = 'u32[144,128]{1,0:T(1,128)}', space=vmem, size = 0x12000, scoped, tag = 'internal scratch']
  %s0 = inlined_call_operand.vmem [shape: f32[1,128], index: 0, kind: input, shape index: {}]
  %s1 = inlined_call_operand.vmem [shape: bf16[128,192], index: 1, kind: input, shape index: {}]
  %s2 = inlined_call_operand.vmem [shape: f32[1,192], index: 2, kind: input, shape index: {}]
  %s3 = inlined_call_operand.hbm [shape: bf16[192,384], index: 3, kind: input, shape index: {}]
  %s4 = inlined_call_operand.vmem [shape: f32[1,384], index: 4, kind: input, shape index: {}]
  %s5 = inlined_call_operand.hbm [shape: bf16[384,256], index: 5, kind: input, shape index: {}]
  %s6 = inlined_call_operand.vmem [shape: f32[1,256], index: 6, kind: input, shape index: {}]
  %s7 = inlined_call_operand.hbm [shape: f32[1,256], index: 7, kind: output, shape index: {}]
  %s8 = sld [smem:[#allocation0]]
  $region46: #{tpu_custom_call.1} parent=0
    _
  %s10 = ssub.s32 1, %s8
  %s11 = scalar_select 0, %s10, %s8
  $region1: #{tpu_custom_call.1} parent=0
    #allocation2 [shape = 'u8[147456]{0}', space=vmem, size = 0x24000, scoped, tag = 'input window, operand 3, single buffered']
    #allocation3 [shape = 's32[1]{0}', space=sflag, size = 0x4, scoped, tag = 'scoped memory for tpu_custom_call.1']
    #allocation4 [shape = 's32[1]{0}', space=sflag, size = 0x4, scoped, tag = 'scoped memory for tpu_custom_call.1']
    #allocation5 [shape = 'u8[196608]{0}', space=vmem, size = 0x30000, scoped, tag = 'input window, operand 5, single buffered']
    #allocation6 [shape = 's32[1]{0}', space=sflag, size = 0x4, scoped, tag = 'scoped memory for tpu_custom_call.1']
    #allocation7 [shape = 'u8[1024]{0}', space=vmem, size = 0x400, scoped, tag = 'output window, operand 0, single buffered']
    %12 = vsyncpa [#allocation3], 0
    %13 = vsyncpa [#allocation6], 0
    %14 = vsyncpa [#allocation4], 0
    // Predicated region
    $region2: #{tpu_custom_call.1} parent=1 // pred_check
      _
    $region3: #{tpu_custom_call.1} parent=1 // pred_check_branch
      %16 = sbr.rel (0) target = $region5
    $region4: #{tpu_custom_call.1} parent=1 // pred_region
      _
    $region5: #{tpu_custom_call.1} parent=1 // pred_fallthru
      _
    // Predicated region
    $region6: #{tpu_custom_call.1} parent=1 // pred_check
      _
    $region7: #{tpu_custom_call.1} parent=1 // pred_check_branch
      %18 = sbr.rel (0) target = $region9
    $region8: #{tpu_custom_call.1} parent=1 // pred_region
      _
    $region9: #{tpu_custom_call.1} parent=1 // pred_fallthru
      _
    // Predicated region
    $region10: #{tpu_custom_call.1} parent=1 // pred_check
      _
    $region11: #{tpu_custom_call.1} parent=1 // pred_check_branch
      %20 = sbr.rel (0) target = $region13
    $region12: #{tpu_custom_call.1} parent=1 // pred_region
      _
    $region13: #{tpu_custom_call.1} parent=1 // pred_fallthru
      _
    // Predicated region
    $region14: #{tpu_custom_call.1} parent=1 // pred_check
      _
    $region15: #{tpu_custom_call.1} parent=1 // pred_check_branch
      %22 = sbr.rel (0) target = $region17
    $region16: #{tpu_custom_call.1} parent=1 // pred_region
      %s24 = ssub.s32 4608, 4608
      %25 = vsyncadd [#allocation3], %s24
      %s26 = sshll.u32 [#allocation2], 4
      %s27 = int_to_ptr.vmem [resolvable:$true] %s26
      %32 = dma.hbm_to_vmem [thread:$0]  %s3, 4608, %s27, [#allocation3], 192, 192, 12
    $region17: #{tpu_custom_call.1} parent=1 // pred_fallthru
      _
    // Predicated region
    $region18: #{tpu_custom_call.1} parent=1 // pred_check
      _
    $region19: #{tpu_custom_call.1} parent=1 // pred_check_branch
      %34 = sbr.rel (0) target = $region21
    $region20: #{tpu_custom_call.1} parent=1 // pred_region
      _
    $region21: #{tpu_custom_call.1} parent=1 // pred_fallthru
      _
    // Predicated region
    $region22: #{tpu_custom_call.1} parent=1 // pred_check
      _
    $region23: #{tpu_custom_call.1} parent=1 // pred_check_branch
      %36 = sbr.rel (0) target = $region25
    $region24: #{tpu_custom_call.1} parent=1 // pred_region
      %s38 = ssub.s32 6144, 6144
      %39 = vsyncadd [#allocation6], %s38
      %s40 = sshll.u32 [#allocation5], 4
      %s41 = int_to_ptr.vmem [resolvable:$true] %s40
      %46 = dma.hbm_to_vmem [thread:$0]  %s5, 6144, %s41, [#allocation6], 128, 128, 8
    $region25: #{tpu_custom_call.1} parent=1 // pred_fallthru
      _
    // Predicated region
    $region26: #{tpu_custom_call.1} parent=1 // pred_check
      _
    $region27: #{tpu_custom_call.1} parent=1 // pred_check_branch
      %48 = sbr.rel (0) target = $region29
    $region28: #{tpu_custom_call.1} parent=1 // pred_region
      _
    $region29: #{tpu_custom_call.1} parent=1 // pred_fallthru
      _
    // Predicated region
    $region30: #{tpu_custom_call.1} parent=1 // pred_check
      _
    $region31: #{tpu_custom_call.1} parent=1 // pred_check_branch
      %50 = sbr.rel (0) target = $region33
    $region32: #{tpu_custom_call.1} parent=1 // pred_region
      %51 = dma.done [#allocation3], 4608
    $region33: #{tpu_custom_call.1} parent=1 // pred_fallthru
      _
    // Predicated region
    $region34: #{tpu_custom_call.1} parent=1 // pred_check
      _
    $region35: #{tpu_custom_call.1} parent=1 // pred_check_branch
      %53 = sbr.rel (0) target = $region37
    $region36: #{tpu_custom_call.1} parent=1 // pred_region
      %54 = dma.done [#allocation6], 6144
    $region37: #{tpu_custom_call.1} parent=1 // pred_fallthru
      _
    %v56 = vld [vmem:[%s0] sm:$0x1]
    %v57 = vpack.c.bf16 %v56, %v56
    %v58 = vld [vmem:[%s1] sm:$0xff]
    %v59 = vld [vmem:[%s1 + $0x8] sm:$0xff]
    %v60 = vld [vmem:[%s1 + $0x10] sm:$0xff]
    %v61 = vld [vmem:[%s1 + $0x18] sm:$0xff]
    %v62 = vld [vmem:[%s1 + $0x20] sm:$0xff]
    %v63 = vld [vmem:[%s1 + $0x28] sm:$0xff]
    %v64 = vld [vmem:[%s1 + $0x30] sm:$0xff]
    %v65 = vld [vmem:[%s1 + $0x38] sm:$0xff]
    %v66 = vld [vmem:[%s1 + $0x40] sm:$0xff]
    %v67 = vld [vmem:[%s1 + $0x48] sm:$0xff]
    %v68 = vld [vmem:[%s1 + $0x50] sm:$0xff]
    %v69 = vld [vmem:[%s1 + $0x58] sm:$0xff]
    %v70 = vld [vmem:[%s1 + $0x60] sm:$0xff]
    %v71 = vld [vmem:[%s1 + $0x68] sm:$0xff]
    %v72 = vld [vmem:[%s1 + $0x70] sm:$0xff]
    %v73 = vld [vmem:[%s1 + $0x78] sm:$0xff]
    %v74 = vld [vmem:[%s2] sm:$0x3]
    %v91 = vunpack.c.l.b16 %v58
    %v92 = vunpack.c.h.b16 %v58
    %v93 = vunpack.c.l.b16 %v59
    %v94 = vunpack.c.h.b16 %v59
    %v95 = vunpack.c.l.b16 %v60
    %v96 = vunpack.c.h.b16 %v60
    %v97 = vunpack.c.l.b16 %v61
    %v98 = vunpack.c.h.b16 %v61
    %v99 = vunpack.c.l.b16 %v62
    %v100 = vunpack.c.h.b16 %v62
    %v101 = vunpack.c.l.b16 %v63
    %v102 = vunpack.c.h.b16 %v63
    %v103 = vunpack.c.l.b16 %v64
    %v104 = vunpack.c.h.b16 %v64
    %v105 = vunpack.c.l.b16 %v65
    %v106 = vunpack.c.h.b16 %v65
    %v107 = vunpack.c.l.b16 %v66
    %v108 = vunpack.c.h.b16 %v66
    %v109 = vunpack.c.l.b16 %v67
    %v110 = vunpack.c.h.b16 %v67
    %v111 = vunpack.c.l.b16 %v68
    %v112 = vunpack.c.h.b16 %v68
    %v113 = vunpack.c.l.b16 %v69
    %v114 = vunpack.c.h.b16 %v69
    %v115 = vunpack.c.l.b16 %v70
    %v116 = vunpack.c.h.b16 %v70
    %v117 = vunpack.c.l.b16 %v71
    %v118 = vunpack.c.h.b16 %v71
    %v119 = vunpack.c.l.b16 %v72
    %v120 = vunpack.c.h.b16 %v72
    %v121 = vunpack.c.l.b16 %v73
    %v122 = vunpack.c.h.b16 %v73
    %v123 = vpack.c.b16 %v93, %v91
    %v124 = vpack.c.b16 %v94, %v92
    %v125 = vpack.c.b16 %v97, %v95
    %v126 = vpack.c.b16 %v98, %v96
    %v127 = vpack.c.b16 %v101, %v99
    %v128 = vpack.c.b16 %v102, %v100
    %v129 = vpack.c.b16 %v105, %v103
    %v130 = vpack.c.b16 %v106, %v104
    %v131 = vpack.c.b16 %v109, %v107
    %v132 = vpack.c.b16 %v110, %v108
    %v133 = vpack.c.b16 %v113, %v111
    %v134 = vpack.c.b16 %v114, %v112
    %v135 = vpack.c.b16 %v117, %v115
    %v136 = vpack.c.b16 %v118, %v116
    %v137 = vpack.c.b16 %v121, %v119
    %v138 = vpack.c.b16 %v122, %v120
    %v156 = vlaneseq
    %v157 = vshrl.u32 %v156, 7
    %v158 = vsub.s32 0, %v157
    %v159 = vrot.slane %v74, %v158
    %v160 = vlaneseq
    %v161 = vshrl.u32 %v160, 7
    %v162 = vsub.s32 1, %v161
    %v163 = vrot.slane %v74, %v162
    %166 = vmatprep.subr.bf16.mxu0 %v124
    %167 = vmatpush1.bf16.msra.mxu0 %v123
    %168 = vmatprep.subr.bf16.mxu0 %v126
    %169 = vmatpush1.bf16.msra.mxu0 %v125
    %170 = vmatprep.subr.bf16.mxu0 %v128
    %171 = vmatpush1.bf16.msra.mxu0 %v127
    %172 = vmatprep.subr.bf16.mxu0 %v130
    %173 = vmatpush1.bf16.msra.mxu0 %v129
    %174 = vmatprep.subr.bf16.mxu0 %v132
    %175 = vmatpush1.bf16.msra.mxu0 %v131
    %176 = vmatprep.subr.bf16.mxu0 %v134
    %177 = vmatpush1.bf16.msra.mxu0 %v133
    %178 = vmatprep.subr.bf16.mxu0 %v136
    %179 = vmatpush1.bf16.msra.mxu0 %v135
    %180 = vmatprep.subr.bf16.mxu0 %v138
    %181 = vmatpush1.bf16.msra.mxu0 %v137
    %182 = vmatprep.subr.bf16.mxu0 0
    %183 = vmatpush1.bf16.msra.mxu0 0
    %184 = vmatprep.subr.bf16.mxu0 0
    %185 = vmatpush1.bf16.msra.mxu0 0
    %186 = vmatprep.subr.bf16.mxu0 0
    %187 = vmatpush1.bf16.msra.mxu0 0
    %188 = vmatprep.subr.bf16.mxu0 0
    %189 = vmatpush1.bf16.msra.mxu0 0
    %190 = vmatprep.subr.bf16.mxu0 0
    %191 = vmatpush1.bf16.msra.mxu0 0
    %192 = vmatprep.subr.bf16.mxu0 0
    %193 = vmatpush1.bf16.msra.mxu0 0
    %194 = vmatprep.subr.bf16.mxu0 0
    %195 = vmatpush1.bf16.msra.mxu0 0
    %196 = vmatprep.subr.bf16.mxu0 0
    %197 = vmatpush1.bf16.msra.mxu0 0
    %198 = vmatprep.mubr.bf16.mxu0 0
    %199 = vmatmul.mubr.bf16.gmra.mrb[0].mxu0 %v57
    %v200 = vpop.f32.mrb[0].mxu0
    %v201 = vadd.f32 %v159, %v200
    %v202 = vpop.f32.mrb[0].mxu0
    %v203 = vadd.f32 %v163, %v202
    %v204 = vpop.f32.mrb[0].mxu0
    %v205 = vpop.f32.mrb[0].mxu0
    %206 = vdwg.mxu0
    %v207 = vmax.f32 %v201, 0.0
    %v208 = vmax.f32 %v203, 0.0
    %v209 = vpack.c.bf16 %v207, %v207
    %v210 = vpack.c.bf16 %v208, %v208
    %v211 = vld [vmem:[#allocation2] sm:$0xff]
    %v212 = vld [vmem:[#allocation2 + $0x8] sm:$0xf]
    %v213 = vld [vmem:[#allocation2 + $0xc] sm:$0xff]
    %v214 = vld [vmem:[#allocation2 + $0x14] sm:$0xf]
    %v215 = vld [vmem:[#allocation2 + $0x18] sm:$0xff]
    %v216 = vld [vmem:[#allocation2 + $0x20] sm:$0xf]
    %v217 = vld [vmem:[#allocation2 + $0x24] sm:$0xff]
    %v218 = vld [vmem:[#allocation2 + $0x2c] sm:$0xf]
    %v219 = vld [vmem:[#allocation2 + $0x30] sm:$0xff]
    %v220 = vld [vmem:[#allocation2 + $0x38] sm:$0xf]
    %v221 = vld [vmem:[#allocation2 + $0x3c] sm:$0xff]
    %v222 = vld [vmem:[#allocation2 + $0x44] sm:$0xf]
    %v223 = vld [vmem:[#allocation2 + $0x48] sm:$0xff]
    %v224 = vld [vmem:[#allocation2 + $0x50] sm:$0xf]
    %v225 = vld [vmem:[#allocation2 + $0x54] sm:$0xff]
    %v226 = vld [vmem:[#allocation2 + $0x5c] sm:$0xf]
    %v227 = vld [vmem:[#allocation2 + $0x60] sm:$0xff]
    %v228 = vld [vmem:[#allocation2 + $0x68] sm:$0xf]
    %v229 = vld [vmem:[#allocation2 + $0x6c] sm:$0xff]
    %v230 = vld [vmem:[#allocation2 + $0x74] sm:$0xf]
    %v231 = vld [vmem:[#allocation2 + $0x78] sm:$0xff]
    %v232 = vld [vmem:[#allocation2 + $0x80] sm:$0xf]
    %v233 = vld [vmem:[#allocation2 + $0x84] sm:$0xff]
    %v234 = vld [vmem:[#allocation2 + $0x8c] sm:$0xf]
    %v235 = vld [vmem:[#allocation2 + $0x90] sm:$0xff]
    %v236 = vld [vmem:[#allocation2 + $0x98] sm:$0xf]
    %v237 = vld [vmem:[#allocation2 + $0x9c] sm:$0xff]
    %v238 = vld [vmem:[#allocation2 + $0xa4] sm:$0xf]
    %v239 = vld [vmem:[#allocation2 + $0xa8] sm:$0xff]
    %v240 = vld [vmem:[#allocation2 + $0xb0] sm:$0xf]
    %v241 = vld [vmem:[#allocation2 + $0xb4] sm:$0xff]
    %v242 = vld [vmem:[#allocation2 + $0xbc] sm:$0xf]
    %v243 = vld [vmem:[#allocation2 + $0xc0] sm:$0xff]
    %v244 = vld [vmem:[#allocation2 + $0xc8] sm:$0xf]
    %v245 = vld [vmem:[#allocation2 + $0xcc] sm:$0xff]
    %v246 = vld [vmem:[#allocation2 + $0xd4] sm:$0xf]
    %v247 = vld [vmem:[#allocation2 + $0xd8] sm:$0xff]
    %v248 = vld [vmem:[#allocation2 + $0xe0] sm:$0xf]
    %v249 = vld [vmem:[#allocation2 + $0xe4] sm:$0xff]
    %v250 = vld [vmem:[#allocation2 + $0xec] sm:$0xf]
    %v251 = vld [vmem:[#allocation2 + $0xf0] sm:$0xff]
    %v252 = vld [vmem:[#allocation2 + $0xf8] sm:$0xf]
    %v253 = vld [vmem:[#allocation2 + $0xfc] sm:$0xff]
    %v254 = vld [vmem:[#allocation2 + $0x104] sm:$0xf]
    %v255 = vld [vmem:[#allocation2 + $0x108] sm:$0xff]
    %v256 = vld [vmem:[#allocation2 + $0x110] sm:$0xf]
    %v257 = vld [vmem:[#allocation2 + $0x114] sm:$0xff]
    %v258 = vld [vmem:[#allocation2 + $0x11c] sm:$0xf]
    %v259 = vld [vmem:[%s4] sm:$0x7]
    %v308 = vunpack.c.l.b16 %v211
    %v309 = vunpack.c.h.b16 %v211
    %v310 = vunpack.c.l.b16 %v212
    %v311 = vunpack.c.l.b16 %v213
    %v312 = vunpack.c.h.b16 %v213
    %v313 = vunpack.c.l.b16 %v214
    %v314 = vunpack.c.l.b16 %v215
    %v315 = vunpack.c.h.b16 %v215
    %v316 = vunpack.c.l.b16 %v216
    %v317 = vunpack.c.l.b16 %v217
    %v318 = vunpack.c.h.b16 %v217
    %v319 = vunpack.c.l.b16 %v218
    %v320 = vunpack.c.l.b16 %v219
    %v321 = vunpack.c.h.b16 %v219
    %v322 = vunpack.c.l.b16 %v220
    %v323 = vunpack.c.l.b16 %v221
    %v324 = vunpack.c.h.b16 %v221
    %v325 = vunpack.c.l.b16 %v222
    %v326 = vunpack.c.l.b16 %v223
    %v327 = vunpack.c.h.b16 %v223
    %v328 = vunpack.c.l.b16 %v224
    %v329 = vunpack.c.l.b16 %v225
    %v330 = vunpack.c.h.b16 %v225
    %v331 = vunpack.c.l.b16 %v226
    %v332 = vunpack.c.l.b16 %v227
    %v333 = vunpack.c.h.b16 %v227
    %v334 = vunpack.c.l.b16 %v228
    %v335 = vunpack.c.l.b16 %v229
    %v336 = vunpack.c.h.b16 %v229
    %v337 = vunpack.c.l.b16 %v230
    %v338 = vunpack.c.l.b16 %v231
    %v339 = vunpack.c.h.b16 %v231
    %v340 = vunpack.c.l.b16 %v232
    %v341 = vunpack.c.l.b16 %v233
    %v342 = vunpack.c.h.b16 %v233
    %v343 = vunpack.c.l.b16 %v234
    %v344 = vunpack.c.l.b16 %v235
    %v345 = vunpack.c.h.b16 %v235
    %v346 = vunpack.c.l.b16 %v236
    %v347 = vunpack.c.l.b16 %v237
    %v348 = vunpack.c.h.b16 %v237
    %v349 = vunpack.c.l.b16 %v238
    %v350 = vunpack.c.l.b16 %v239
    %v351 = vunpack.c.h.b16 %v239
    %v352 = vunpack.c.l.b16 %v240
    %v353 = vunpack.c.l.b16 %v241
    %v354 = vunpack.c.h.b16 %v241
    %v355 = vunpack.c.l.b16 %v242
    %v356 = vunpack.c.l.b16 %v243
    %v357 = vunpack.c.h.b16 %v243
    %v358 = vunpack.c.l.b16 %v244
    %v359 = vunpack.c.l.b16 %v245
    %v360 = vunpack.c.h.b16 %v245
    %v361 = vunpack.c.l.b16 %v246
    %v362 = vunpack.c.l.b16 %v247
    %v363 = vunpack.c.h.b16 %v247
    %v364 = vunpack.c.l.b16 %v248
    %v365 = vunpack.c.l.b16 %v249
    %v366 = vunpack.c.h.b16 %v249
    %v367 = vunpack.c.l.b16 %v250
    %v368 = vunpack.c.l.b16 %v251
    %v369 = vunpack.c.h.b16 %v251
    %v370 = vunpack.c.l.b16 %v252
    %v371 = vunpack.c.l.b16 %v253
    %v372 = vunpack.c.h.b16 %v253
    %v373 = vunpack.c.l.b16 %v254
    %v374 = vunpack.c.l.b16 %v255
    %v375 = vunpack.c.h.b16 %v255
    %v376 = vunpack.c.l.b16 %v256
    %v377 = vunpack.c.l.b16 %v257
    %v378 = vunpack.c.h.b16 %v257
    %v379 = vunpack.c.l.b16 %v258
    %v380 = vpack.c.b16 %v311, %v308
    %v381 = vpack.c.b16 %v312, %v309
    %v382 = vpack.c.b16 %v313, %v310
    %v383 = vpack.c.b16 %v317, %v314
    %v384 = vpack.c.b16 %v318, %v315
    %v385 = vpack.c.b16 %v319, %v316
    %v386 = vpack.c.b16 %v323, %v320
    %v387 = vpack.c.b16 %v324, %v321
    %v388 = vpack.c.b16 %v325, %v322
    %v389 = vpack.c.b16 %v329, %v326
    %v390 = vpack.c.b16 %v330, %v327
    %v391 = vpack.c.b16 %v331, %v328
    %v392 = vpack.c.b16 %v335, %v332
    %v393 = vpack.c.b16 %v336, %v333
    %v394 = vpack.c.b16 %v337, %v334
    %v395 = vpack.c.b16 %v341, %v338
    %v396 = vpack.c.b16 %v342, %v339
    %v397 = vpack.c.b16 %v343, %v340
    %v398 = vpack.c.b16 %v347, %v344
    %v399 = vpack.c.b16 %v348, %v345
    %v400 = vpack.c.b16 %v349, %v346
    %v401 = vpack.c.b16 %v353, %v350
    %v402 = vpack.c.b16 %v354, %v351
    %v403 = vpack.c.b16 %v355, %v352
    %v404 = vpack.c.b16 %v359, %v356
    %v405 = vpack.c.b16 %v360, %v357
    %v406 = vpack.c.b16 %v361, %v358
    %v407 = vpack.c.b16 %v365, %v362
    %v408 = vpack.c.b16 %v366, %v363
    %v409 = vpack.c.b16 %v367, %v364
    %v410 = vpack.c.b16 %v371, %v368
    %v411 = vpack.c.b16 %v372, %v369
    %v412 = vpack.c.b16 %v373, %v370
    %v413 = vpack.c.b16 %v377, %v374
    %v414 = vpack.c.b16 %v378, %v375
    %v415 = vpack.c.b16 %v379, %v376
    %v453 = vlaneseq
    %v454 = vshrl.u32 %v453, 7
    %v455 = vsub.s32 0, %v454
    %v456 = vrot.slane %v259, %v455
    %v457 = vlaneseq
    %v458 = vshrl.u32 %v457, 7
    %v459 = vsub.s32 1, %v458
    %v460 = vrot.slane %v259, %v459
    %v461 = vlaneseq
    %v462 = vshrl.u32 %v461, 7
    %v463 = vsub.s32 2, %v462
    %v464 = vrot.slane %v259, %v463
    %vm468 = vcmask 523264
    %v470 = vsel %vm468, %v210, 0
    %472 = vmatprep.subr.bf16.mxu0 %v381
    %473 = vmatpush1.bf16.msra.mxu0 %v380
    %474 = vmatprep.subr.bf16.mxu0 %v384
    %475 = vmatpush1.bf16.msra.mxu0 %v383
    %476 = vmatprep.subr.bf16.mxu0 %v387
    %477 = vmatpush1.bf16.msra.mxu0 %v386
    %478 = vmatprep.subr.bf16.mxu0 %v390
    %479 = vmatpush1.bf16.msra.mxu0 %v389
    %480 = vmatprep.subr.bf16.mxu0 %v393
    %481 = vmatpush1.bf16.msra.mxu0 %v392
    %482 = vmatprep.subr.bf16.mxu0 %v396
    %483 = vmatpush1.bf16.msra.mxu0 %v395
    %484 = vmatprep.subr.bf16.mxu0 %v399
    %485 = vmatpush1.bf16.msra.mxu0 %v398
    %486 = vmatprep.subr.bf16.mxu0 %v402
    %487 = vmatpush1.bf16.msra.mxu0 %v401
    %488 = vmatprep.subr.bf16.mxu0 %v405
    %489 = vmatpush1.bf16.msra.mxu0 %v404
    %490 = vmatprep.subr.bf16.mxu0 %v408
    %491 = vmatpush1.bf16.msra.mxu0 %v407
    %492 = vmatprep.subr.bf16.mxu0 %v411
    %493 = vmatpush1.bf16.msra.mxu0 %v410
    %494 = vmatprep.subr.bf16.mxu0 %v414
    %495 = vmatpush1.bf16.msra.mxu0 %v413
    %496 = vmatprep.subr.bf16.mxu0 0
    %497 = vmatpush1.bf16.msra.mxu0 0
    %498 = vmatprep.subr.bf16.mxu0 0
    %499 = vmatpush1.bf16.msra.mxu0 0
    %500 = vmatprep.subr.bf16.mxu0 0
    %501 = vmatpush1.bf16.msra.mxu0 0
    %502 = vmatprep.subr.bf16.mxu0 0
    %503 = vmatpush1.bf16.msra.mxu0 0
    %504 = vmatprep.mubr.bf16.mxu0 %v470
    %505 = vmatmul.mubr.bf16.gmra.mrb[0].mxu0 %v209
    %v506 = vpop.f32.mrb[0].mxu0
    %v507 = vadd.f32 %v456, %v506
    %v508 = vpop.f32.mrb[0].mxu0
    %v509 = vadd.f32 %v460, %v508
    %v510 = vpop.f32.mrb[0].mxu0
    %v511 = vpop.f32.mrb[0].mxu0
    %512 = vdwg.mxu0
    %513 = vmatprep.subr.bf16.mxu0 0
    %514 = vmatpush1.bf16.msra.mxu0 %v382
    %515 = vmatprep.subr.bf16.mxu0 0
    %516 = vmatpush1.bf16.msra.mxu0 %v385
    %517 = vmatprep.subr.bf16.mxu0 0
    %518 = vmatpush1.bf16.msra.mxu0 %v388
    %519 = vmatprep.subr.bf16.mxu0 0
    %520 = vmatpush1.bf16.msra.mxu0 %v391
    %521 = vmatprep.subr.bf16.mxu0 0
    %522 = vmatpush1.bf16.msra.mxu0 %v394
    %523 = vmatprep.subr.bf16.mxu0 0
    %524 = vmatpush1.bf16.msra.mxu0 %v397
    %525 = vmatprep.subr.bf16.mxu0 0
    %526 = vmatpush1.bf16.msra.mxu0 %v400
    %527 = vmatprep.subr.bf16.mxu0 0
    %528 = vmatpush1.bf16.msra.mxu0 %v403
    %529 = vmatprep.subr.bf16.mxu0 0
    %530 = vmatpush1.bf16.msra.mxu0 %v406
    %531 = vmatprep.subr.bf16.mxu0 0
    %532 = vmatpush1.bf16.msra.mxu0 %v409
    %533 = vmatprep.subr.bf16.mxu0 0
    %534 = vmatpush1.bf16.msra.mxu0 %v412
    %535 = vmatprep.subr.bf16.mxu0 0
    %536 = vmatpush1.bf16.msra.mxu0 %v415
    %537 = vmatprep.subr.bf16.mxu0 0
    %538 = vmatpush1.bf16.msra.mxu0 0
    %539 = vmatprep.subr.bf16.mxu0 0
    %540 = vmatpush1.bf16.msra.mxu0 0
    %541 = vmatprep.subr.bf16.mxu0 0
    %542 = vmatpush1.bf16.msra.mxu0 0
    %543 = vmatprep.subr.bf16.mxu0 0
    %544 = vmatpush1.bf16.msra.mxu0 0
    %545 = vmatprep.mubr.bf16.mxu0 %v470
    %546 = vmatmul.mubr.bf16.gmra.mrb[0].mxu0 %v209
    %v547 = vpop.f32.mrb[0].mxu0
    %v548 = vadd.f32 %v464, %v547
    %v549 = vpop.f32.mrb[0].mxu0
    %v550 = vpop.f32.mrb[0].mxu0
    %v551 = vpop.f32.mrb[0].mxu0
    %552 = vdwg.mxu0
    %v553 = vmax.f32 %v507, 0.0
    %v554 = vmax.f32 %v509, 0.0
    %v555 = vmax.f32 %v548, 0.0
    %v556 = vpack.c.bf16 %v553, %v553
    %v557 = vpack.c.bf16 %v554, %v554
    %v558 = vpack.c.bf16 %v555, %v555
    %v559 = vld [vmem:[#allocation5] sm:$0xff]
    %v560 = vld [vmem:[#allocation5 + $0x8] sm:$0xff]
    %v561 = vld [vmem:[#allocation5 + $0x10] sm:$0xff]
    %v562 = vld [vmem:[#allocation5 + $0x18] sm:$0xff]
    %v563 = vld [vmem:[#allocation5 + $0x20] sm:$0xff]
    %v564 = vld [vmem:[#allocation5 + $0x28] sm:$0xff]
    %v565 = vld [vmem:[#allocation5 + $0x30] sm:$0xff]
    %v566 = vld [vmem:[#allocation5 + $0x38] sm:$0xff]
    %v567 = vld [vmem:[#allocation5 + $0x40] sm:$0xff]
    %v568 = vld [vmem:[#allocation5 + $0x48] sm:$0xff]
    %v569 = vld [vmem:[#allocation5 + $0x50] sm:$0xff]
    %v570 = vld [vmem:[#allocation5 + $0x58] sm:$0xff]
    %v571 = vld [vmem:[#allocation5 + $0x60] sm:$0xff]
    %v572 = vld [vmem:[#allocation5 + $0x68] sm:$0xff]
    %v573 = vld [vmem:[#allocation5 + $0x70] sm:$0xff]
    %v574 = vld [vmem:[#allocation5 + $0x78] sm:$0xff]
    %v575 = vld [vmem:[#allocation5 + $0x80] sm:$0xff]
    %v576 = vld [vmem:[#allocation5 + $0x88] sm:$0xff]
    %v577 = vld [vmem:[#allocation5 + $0x90] sm:$0xff]
    %v578 = vld [vmem:[#allocation5 + $0x98] sm:$0xff]
    %v579 = vld [vmem:[#allocation5 + $0xa0] sm:$0xff]
    %v580 = vld [vmem:[#allocation5 + $0xa8] sm:$0xff]
    %v581 = vld [vmem:[#allocation5 + $0xb0] sm:$0xff]
    %v582 = vld [vmem:[#allocation5 + $0xb8] sm:$0xff]
    %v583 = vld [vmem:[#allocation5 + $0xc0] sm:$0xff]
    %v584 = vld [vmem:[#allocation5 + $0xc8] sm:$0xff]
    %v585 = vld [vmem:[#allocation5 + $0xd0] sm:$0xff]
    %v586 = vld [vmem:[#allocation5 + $0xd8] sm:$0xff]
    %v587 = vld [vmem:[#allocation5 + $0xe0] sm:$0xff]
    %v588 = vld [vmem:[#allocation5 + $0xe8] sm:$0xff]
    %v589 = vld [vmem:[#allocation5 + $0xf0] sm:$0xff]
    %v590 = vld [vmem:[#allocation5 + $0xf8] sm:$0xff]
    %v591 = vld [vmem:[#allocation5 + $0x100] sm:$0xff]
    %v592 = vld [vmem:[#allocation5 + $0x108] sm:$0xff]
    %v593 = vld [vmem:[#allocation5 + $0x110] sm:$0xff]
    %v594 = vld [vmem:[#allocation5 + $0x118] sm:$0xff]
    %v595 = vld [vmem:[#allocation5 + $0x120] sm:$0xff]
    %v596 = vld [vmem:[#allocation5 + $0x128] sm:$0xff]
    %v597 = vld [vmem:[#allocation5 + $0x130] sm:$0xff]
    %v598 = vld [vmem:[#allocation5 + $0x138] sm:$0xff]
    %v599 = vld [vmem:[#allocation5 + $0x140] sm:$0xff]
    %v600 = vld [vmem:[#allocation5 + $0x148] sm:$0xff]
    %v601 = vld [vmem:[#allocation5 + $0x150] sm:$0xff]
    %v602 = vld [vmem:[#allocation5 + $0x158] sm:$0xff]
    %v603 = vld [vmem:[#allocation5 + $0x160] sm:$0xff]
    %v604 = vld [vmem:[#allocation5 + $0x168] sm:$0xff]
    %v605 = vld [vmem:[#allocation5 + $0x170] sm:$0xff]
    %v606 = vld [vmem:[#allocation5 + $0x178] sm:$0xff]
    %v607 = vld [vmem:[%s6] sm:$0x3]
    %v656 = vunpack.c.l.b16 %v559
    %v657 = vunpack.c.h.b16 %v559
    %v658 = vunpack.c.l.b16 %v560
    %v659 = vunpack.c.h.b16 %v560
    %v660 = vunpack.c.l.b16 %v561
    %v661 = vunpack.c.h.b16 %v561
    %v662 = vunpack.c.l.b16 %v562
    %v663 = vunpack.c.h.b16 %v562
    %v664 = vunpack.c.l.b16 %v563
    %v665 = vunpack.c.h.b16 %v563
    %v666 = vunpack.c.l.b16 %v564
    %v667 = vunpack.c.h.b16 %v564
    %v668 = vunpack.c.l.b16 %v565
    %v669 = vunpack.c.h.b16 %v565
    %v670 = vunpack.c.l.b16 %v566
    %v671 = vunpack.c.h.b16 %v566
    %v672 = vunpack.c.l.b16 %v567
    %v673 = vunpack.c.h.b16 %v567
    %v674 = vunpack.c.l.b16 %v568
    %v675 = vunpack.c.h.b16 %v568
    %v676 = vunpack.c.l.b16 %v569
    %v677 = vunpack.c.h.b16 %v569
    %v678 = vunpack.c.l.b16 %v570
    %v679 = vunpack.c.h.b16 %v570
    %v680 = vunpack.c.l.b16 %v571
    %v681 = vunpack.c.h.b16 %v571
    %v682 = vunpack.c.l.b16 %v572
    %v683 = vunpack.c.h.b16 %v572
    %v684 = vunpack.c.l.b16 %v573
    %v685 = vunpack.c.h.b16 %v573
    %v686 = vunpack.c.l.b16 %v574
    %v687 = vunpack.c.h.b16 %v574
    %v688 = vunpack.c.l.b16 %v575
    %v689 = vunpack.c.h.b16 %v575
    %v690 = vunpack.c.l.b16 %v576
    %v691 = vunpack.c.h.b16 %v576
    %v692 = vunpack.c.l.b16 %v577
    %v693 = vunpack.c.h.b16 %v577
    %v694 = vunpack.c.l.b16 %v578
    %v695 = vunpack.c.h.b16 %v578
    %v696 = vunpack.c.l.b16 %v579
    %v697 = vunpack.c.h.b16 %v579
    %v698 = vunpack.c.l.b16 %v580
    %v699 = vunpack.c.h.b16 %v580
    %v700 = vunpack.c.l.b16 %v581
    %v701 = vunpack.c.h.b16 %v581
    %v702 = vunpack.c.l.b16 %v582
    %v703 = vunpack.c.h.b16 %v582
    %v704 = vunpack.c.l.b16 %v583
    %v705 = vunpack.c.h.b16 %v583
    %v706 = vunpack.c.l.b16 %v584
    %v707 = vunpack.c.h.b16 %v584
    %v708 = vunpack.c.l.b16 %v585
    %v709 = vunpack.c.h.b16 %v585
    %v710 = vunpack.c.l.b16 %v586
    %v711 = vunpack.c.h.b16 %v586
    %v712 = vunpack.c.l.b16 %v587
    %v713 = vunpack.c.h.b16 %v587
    %v714 = vunpack.c.l.b16 %v588
    %v715 = vunpack.c.h.b16 %v588
    %v716 = vunpack.c.l.b16 %v589
    %v717 = vunpack.c.h.b16 %v589
    %v718 = vunpack.c.l.b16 %v590
    %v719 = vunpack.c.h.b16 %v590
    %v720 = vunpack.c.l.b16 %v591
    %v721 = vunpack.c.h.b16 %v591
    %v722 = vunpack.c.l.b16 %v592
    %v723 = vunpack.c.h.b16 %v592
    %v724 = vunpack.c.l.b16 %v593
    %v725 = vunpack.c.h.b16 %v593
    %v726 = vunpack.c.l.b16 %v594
    %v727 = vunpack.c.h.b16 %v594
    %v728 = vunpack.c.l.b16 %v595
    %v729 = vunpack.c.h.b16 %v595
    %v730 = vunpack.c.l.b16 %v596
    %v731 = vunpack.c.h.b16 %v596
    %v732 = vunpack.c.l.b16 %v597
    %v733 = vunpack.c.h.b16 %v597
    %v734 = vunpack.c.l.b16 %v598
    %v735 = vunpack.c.h.b16 %v598
    %v736 = vunpack.c.l.b16 %v599
    %v737 = vunpack.c.h.b16 %v599
    %v738 = vunpack.c.l.b16 %v600
    %v739 = vunpack.c.h.b16 %v600
    %v740 = vunpack.c.l.b16 %v601
    %v741 = vunpack.c.h.b16 %v601
    %v742 = vunpack.c.l.b16 %v602
    %v743 = vunpack.c.h.b16 %v602
    %v744 = vunpack.c.l.b16 %v603
    %v745 = vunpack.c.h.b16 %v603
    %v746 = vunpack.c.l.b16 %v604
    %v747 = vunpack.c.h.b16 %v604
    %v748 = vunpack.c.l.b16 %v605
    %v749 = vunpack.c.h.b16 %v605
    %v750 = vunpack.c.l.b16 %v606
    %v751 = vunpack.c.h.b16 %v606
    %v752 = vpack.c.b16 %v658, %v656
    %v753 = vpack.c.b16 %v659, %v657
    %v754 = vpack.c.b16 %v662, %v660
    %v755 = vpack.c.b16 %v663, %v661
    %v756 = vpack.c.b16 %v666, %v664
    %v757 = vpack.c.b16 %v667, %v665
    %v758 = vpack.c.b16 %v670, %v668
    %v759 = vpack.c.b16 %v671, %v669
    %v760 = vpack.c.b16 %v674, %v672
    %v761 = vpack.c.b16 %v675, %v673
    %v762 = vpack.c.b16 %v678, %v676
    %v763 = vpack.c.b16 %v679, %v677
    %v764 = vpack.c.b16 %v682, %v680
    %v765 = vpack.c.b16 %v683, %v681
    %v766 = vpack.c.b16 %v686, %v684
    %v767 = vpack.c.b16 %v687, %v685
    %v768 = vpack.c.b16 %v690, %v688
    %v769 = vpack.c.b16 %v691, %v689
    %v770 = vpack.c.b16 %v694, %v692
    %v771 = vpack.c.b16 %v695, %v693
    %v772 = vpack.c.b16 %v698, %v696
    %v773 = vpack.c.b16 %v699, %v697
    %v774 = vpack.c.b16 %v702, %v700
    %v775 = vpack.c.b16 %v703, %v701
    %v776 = vpack.c.b16 %v706, %v704
    %v777 = vpack.c.b16 %v707, %v705
    %v778 = vpack.c.b16 %v710, %v708
    %v779 = vpack.c.b16 %v711, %v709
    %v780 = vpack.c.b16 %v714, %v712
    %v781 = vpack.c.b16 %v715, %v713
    %v782 = vpack.c.b16 %v718, %v716
    %v783 = vpack.c.b16 %v719, %v717
    %v784 = vpack.c.b16 %v722, %v720
    %v785 = vpack.c.b16 %v723, %v721
    %v786 = vpack.c.b16 %v726, %v724
    %v787 = vpack.c.b16 %v727, %v725
    %v788 = vpack.c.b16 %v730, %v728
    %v789 = vpack.c.b16 %v731, %v729
    %v790 = vpack.c.b16 %v734, %v732
    %v791 = vpack.c.b16 %v735, %v733
    %v792 = vpack.c.b16 %v738, %v736
    %v793 = vpack.c.b16 %v739, %v737
    %v794 = vpack.c.b16 %v742, %v740
    %v795 = vpack.c.b16 %v743, %v741
    %v796 = vpack.c.b16 %v746, %v744
    %v797 = vpack.c.b16 %v747, %v745
    %v798 = vpack.c.b16 %v750, %v748
    %v799 = vpack.c.b16 %v751, %v749
    %v849 = vlaneseq
    %v850 = vshrl.u32 %v849, 7
    %v851 = vsub.s32 0, %v850
    %v852 = vrot.slane %v607, %v851
    %v853 = vlaneseq
    %v854 = vshrl.u32 %v853, 7
    %v855 = vsub.s32 1, %v854
    %v856 = vrot.slane %v607, %v855
    %859 = vmatprep.subr.bf16.mxu0 %v753
    %860 = vmatpush1.bf16.msra.mxu0 %v752
    %861 = vmatprep.subr.bf16.mxu0 %v755
    %862 = vmatpush1.bf16.msra.mxu0 %v754
    %863 = vmatprep.subr.bf16.mxu0 %v757
    %864 = vmatpush1.bf16.msra.mxu0 %v756
    %865 = vmatprep.subr.bf16.mxu0 %v759
    %866 = vmatpush1.bf16.msra.mxu0 %v758
    %867 = vmatprep.subr.bf16.mxu0 %v761
    %868 = vmatpush1.bf16.msra.mxu0 %v760
    %869 = vmatprep.subr.bf16.mxu0 %v763
    %870 = vmatpush1.bf16.msra.mxu0 %v762
    %871 = vmatprep.subr.bf16.mxu0 %v765
    %872 = vmatpush1.bf16.msra.mxu0 %v764
    %873 = vmatprep.subr.bf16.mxu0 %v767
    %874 = vmatpush1.bf16.msra.mxu0 %v766
    %875 = vmatprep.subr.bf16.mxu0 %v769
    %876 = vmatpush1.bf16.msra.mxu0 %v768
    %877 = vmatprep.subr.bf16.mxu0 %v771
    %878 = vmatpush1.bf16.msra.mxu0 %v770
    %879 = vmatprep.subr.bf16.mxu0 %v773
    %880 = vmatpush1.bf16.msra.mxu0 %v772
    %881 = vmatprep.subr.bf16.mxu0 %v775
    %882 = vmatpush1.bf16.msra.mxu0 %v774
    %883 = vmatprep.subr.bf16.mxu0 %v777
    %884 = vmatpush1.bf16.msra.mxu0 %v776
    %885 = vmatprep.subr.bf16.mxu0 %v779
    %886 = vmatpush1.bf16.msra.mxu0 %v778
    %887 = vmatprep.subr.bf16.mxu0 %v781
    %888 = vmatpush1.bf16.msra.mxu0 %v780
    %889 = vmatprep.subr.bf16.mxu0 %v783
    %890 = vmatpush1.bf16.msra.mxu0 %v782
    %891 = vmatprep.mubr.bf16.mxu0 %v557
    %892 = vmatmul.mubr.bf16.gmra.mrb[0].mxu0 %v556
    %v893 = vpop.f32.mrb[0].mxu0
    %v894 = vadd.f32 %v852, %v893
    %v895 = vpop.f32.mrb[0].mxu0
    %v896 = vadd.f32 %v856, %v895
    %v897 = vpop.f32.mrb[0].mxu0
    %v898 = vpop.f32.mrb[0].mxu0
    %899 = vdwg.mxu0
    %900 = vmatprep.subr.bf16.mxu0 %v785
    %901 = vmatpush1.bf16.msra.mxu0 %v784
    %902 = vmatprep.subr.bf16.mxu0 %v787
    %903 = vmatpush1.bf16.msra.mxu0 %v786
    %904 = vmatprep.subr.bf16.mxu0 %v789
    %905 = vmatpush1.bf16.msra.mxu0 %v788
    %906 = vmatprep.subr.bf16.mxu0 %v791
    %907 = vmatpush1.bf16.msra.mxu0 %v790
    %908 = vmatprep.subr.bf16.mxu0 %v793
    %909 = vmatpush1.bf16.msra.mxu0 %v792
    %910 = vmatprep.subr.bf16.mxu0 %v795
    %911 = vmatpush1.bf16.msra.mxu0 %v794
    %912 = vmatprep.subr.bf16.mxu0 %v797
    %913 = vmatpush1.bf16.msra.mxu0 %v796
    %914 = vmatprep.subr.bf16.mxu0 %v799
    %915 = vmatpush1.bf16.msra.mxu0 %v798
    %916 = vmatprep.subr.bf16.mxu0 0
    %917 = vmatpush1.bf16.msra.mxu0 0
    %918 = vmatprep.subr.bf16.mxu0 0
    %919 = vmatpush1.bf16.msra.mxu0 0
    %920 = vmatprep.subr.bf16.mxu0 0
    %921 = vmatpush1.bf16.msra.mxu0 0
    %922 = vmatprep.subr.bf16.mxu0 0
    %923 = vmatpush1.bf16.msra.mxu0 0
    %924 = vmatprep.subr.bf16.mxu0 0
    %925 = vmatpush1.bf16.msra.mxu0 0
    %926 = vmatprep.subr.bf16.mxu0 0
    %927 = vmatpush1.bf16.msra.mxu0 0
    %928 = vmatprep.subr.bf16.mxu0 0
    %929 = vmatpush1.bf16.msra.mxu0 0
    %930 = vmatprep.subr.bf16.mxu0 0
    %931 = vmatpush1.bf16.msra.mxu0 0
    %932 = vmatprep.mubr.bf16.mxu0 0
    %933 = vmatmul.mubr.bf16.gmra.mrb[0].mxu0 %v558
    %v934 = vpop.f32.mrb[0].mxu0
    %v935 = vadd.f32 %v894, %v934
    %v936 = vpop.f32.mrb[0].mxu0
    %v937 = vadd.f32 %v896, %v936
    %v938 = vpop.f32.mrb[0].mxu0
    %v939 = vpop.f32.mrb[0].mxu0
    %940 = vdwg.mxu0
    %v941 = vmax.f32 %v935, 0.0
    %v942 = vmax.f32 %v937, 0.0
    %v945 = vcombine.low %v941, %v942
    %v947 = vunpack.c.l.s4 1966171168
    %v948 = vunpack.c.0.s8 %v947
    %v949 = vlaneseq
    %v950 = vshrl.u32 %v949, 7
    %v951 = vsub.s32 %v948, %v950
    %v952 = vrot.slane %v945, %v951
    %v954 = vunpack.c.l.s4 1966171168
    %v955 = vunpack.c.0.s8 %v954
    %v956 = vlaneseq
    %v957 = vshrl.u32 %v956, 7
    %v958 = vsub.s32 %v955, %v957
    %v959 = vrot.slane %v952, %v958
    %v961 = vlaneseq
    %vm962 = vcmp.ge.s32.totalorder %v961, 0
    %vm963 = vcmp.lt.s32.totalorder %v961, 256
    %vm964 = vmand %vm962, %vm963
    %965 = vst.msk [vmem:[#allocation7] sm:$0x3] %vm964, %v959
    // Predicated region
    $region38: #{tpu_custom_call.1} parent=1 // pred_check
      _
    $region39: #{tpu_custom_call.1} parent=1 // pred_check_branch
      %967 = sbr.rel (0) target = $region41
    $region40: #{tpu_custom_call.1} parent=1 // pred_region
      %s969 = ssub.s32 32, 32
      %970 = vsyncadd [#allocation4], %s969
      %s972 = sshll.u32 [#allocation7], 4
      %s973 = int_to_ptr.vmem [resolvable:$true] %s972
      %975 = dma.vmem_to_hbm [thread:$0]  %s973, 32, %s7, [#allocation4]
    $region41: #{tpu_custom_call.1} parent=1 // pred_fallthru
      _
    // Predicated region
    $region42: #{tpu_custom_call.1} parent=1 // pred_check
      _
    $region43: #{tpu_custom_call.1} parent=1 // pred_check_branch
      %977 = sbr.rel (0) target = $region45
    $region44: #{tpu_custom_call.1} parent=1 // pred_region
      %978 = dma.done [#allocation4], 32
    $region45: #{tpu_custom_call.1} parent=1 // pred_fallthru
      _
    %979 = vsyncpa [#allocation3], 1
    %980 = vsyncpa [#allocation6], 1
    %981 = vsyncpa [#allocation4], 1

</llo_original>
